<compile_context>
chip_gen: v5e
topology: v5e:2x2
jax: 0.10.0
libtpu: 0.0.40
codegen_flags: <defaults>
</compile_context>

<pallas_src>
import math

import jax
import jax.numpy as jnp
from jax.experimental import pallas as pl
from jax.experimental.pallas import tpu as pltpu


def _pool_out_size(size: int, kernel: int, stride: int, ceil_mode: bool) -> int:
    if ceil_mode:
        out = math.ceil((size - kernel) / stride) + 1
        # PyTorch rule: the last window must start inside the (unpadded) input.
        if (out - 1) * stride >= size:
            out -= 1
        return max(out, 1)
    return (size - kernel) // stride + 1


def _round_up(x: int, m: int) -> int:
    return ((x + m - 1) // m) * m


def _make_maxpool_kernel(H, W, OH, OW, kernel, stride):
    """Kernel body.  x_ref: (H*W, TB), o_ref: (OH*OW, TB); batch on the lane axis."""

    def maxpool_kernel(x_ref, o_ref):
        for oh in range(OH):
            hs = oh * stride
            he = min(hs + kernel, H)          # ceil_mode: truncate window at edge
            for ow in range(OW):
                ws = ow * stride
                we = min(ws + kernel, W)
                m = None
                # Elementwise maximum tree over the (<= kernel*kernel) window rows.
                # Each row is a lane-dense (TB,) vector -> pure VPU jnp.maximum.
                for kh in range(hs, he):
                    for kw in range(ws, we):
                        row = x_ref[kh * W + kw, :]
                        m = row if m is None else jnp.maximum(m, row)
                o_ref[oh * OW + ow, :] = m

    return maxpool_kernel


def my_network_forward(x_nchw, kernel=3, stride=None, ceil_mode=True, max_tb=8192):
    """Forward pass of MyNetwork: MaxPool2d(kernel_size=3, ceil_mode=True)."""
    if stride is None:
        stride = kernel  # PyTorch default: stride = kernel_size
    N, C, H, W = x_nchw.shape
    OH = _pool_out_size(H, kernel, stride, ceil_mode)
    OW = _pool_out_size(W, kernel, stride, ceil_mode)
    B = N * C

    # Batch tile: lane-dense multiple of 128; capped so (H*W, TB) in + (OH*OW, TB)
    # out, double-buffered, stays well under the scoped VMEM limit on all of
    # v5e / v6e / v7x (<= ~2 MiB total at TB=8192, f32).
    TB = min(max_tb, _round_up(B, 128))
    B_padded = _round_up(B, TB)
    num_blocks = B_padded // TB

    # Re-layout: (N,C,H,W) -> (H*W, B), then pad the lane axis up to B_padded.
    # (Wrapper-side transpose is layout plumbing; padded lanes are sliced off.)
    x_flat = x_nchw.reshape(B, H * W).T  # (H*W, B)
    if B_padded != B:
        x_flat = jnp.pad(x_flat, ((0, 0), (0, B_padded - B)))

    out_flat = pl.pallas_call(
        _make_maxpool_kernel(H, W, OH, OW, kernel, stride),
        out_shape=jax.ShapeDtypeStruct((OH * OW, B_padded), x_nchw.dtype),
        grid=(num_blocks,),
        in_specs=[pl.BlockSpec((H * W, TB), lambda i: (0, i))],
        out_specs=pl.BlockSpec((OH * OW, TB), lambda i: (0, i)),
        compiler_params=pltpu.CompilerParams(
            dimension_semantics=("parallel",),  # shards batch across TCs on v7x
        ),
    )(x_flat)

    # (OH*OW, B_padded) -> (N, C, OH, OW)
    out = out_flat[:, :B].T.reshape(N, C, OH, OW)
    return out


def _reference_maxpool(x_nchw, kernel=3, stride=3, ceil_mode=True):
    N, C, H, W = x_nchw.shape
    OH = _pool_out_size(H, kernel, stride, ceil_mode)
    OW = _pool_out_size(W, kernel, stride, ceil_mode)
    out = jnp.full((N, C, OH, OW), -jnp.inf, dtype=x_nchw.dtype)
    for oh in range(OH):
        for ow in range(OW):
            hs, ws = oh * stride, ow * stride
            he, we = min(hs + kernel, H), min(ws + kernel, W)
            out = out.at[:, :, oh, ow].set(
                jnp.max(x_nchw[:, :, hs:he, ws:we], axis=(2, 3))
            )
    return out


if __name__ == "__main__":
    key = jax.random.PRNGKey(0)

    # Small case matching the original script: input reshaped to (-1, 1, 5, 5).
    x_small = jax.random.normal(key, (2, 1, 5, 5), dtype=jnp.float32)
    out_small = jax.block_until_ready(my_network_forward(x_small))
    assert out_small.shape == (2, 1, 2, 2), out_small.shape
    ref_small = _reference_maxpool(x_small)
    assert jnp.allclose(out_small, ref_small), (out_small, ref_small)

    # Larger batch to exercise the batch grid + tail padding (TB=128 here).
    x_big = jax.random.normal(key, (300, 1, 5, 5), dtype=jnp.float32)
    out_big = jax.block_until_ready(
        my_network_forward(x_big, max_tb=128)  # force num_blocks > 1
    )
    assert out_big.shape == (300, 1, 2, 2), out_big.shape
    ref_big = _reference_maxpool(x_big)
    assert jnp.allclose(out_big, ref_big), "large-batch mismatch"

    print("KERNEL_OK")
</pallas_src>

<mosaic_0001>
module attributes {stable_mosaic.version = 11 : i64} {
  func.func @maxpool_kernel(%arg0: i32, %arg1: memref<25x128xf32, #tpu.memory_space<vmem>>, %arg2: memref<4x128xf32, #tpu.memory_space<vmem>>) attributes {dimension_semantics = [#tpu.dimension_semantics<parallel>], iteration_bounds = array<i64: 1>, scalar_prefetch = 0 : i64, scratch_operands = 0 : i64, tpu.core_type = #tpu.core_type<tc>, window_params = [{transform_indices = @transform_0, window_bounds = array<i64: 25, 128>}, {transform_indices = @transform_1, window_bounds = array<i64: 4, 128>}]} {
    %c0 = arith.constant 0 : index
    %c0_0 = arith.constant 0 : index
    %0 = vector.load %arg1[%c0, %c0_0] : memref<25x128xf32, #tpu.memory_space<vmem>>, vector<1x128xf32>
    %1 = vector.shape_cast %0 : vector<1x128xf32> to vector<128xf32>
    %c1 = arith.constant 1 : index
    %c0_1 = arith.constant 0 : index
    %2 = vector.load %arg1[%c1, %c0_1] : memref<25x128xf32, #tpu.memory_space<vmem>>, vector<1x128xf32>
    %3 = vector.shape_cast %2 : vector<1x128xf32> to vector<128xf32>
    %4 = arith.maximumf %1, %3 : vector<128xf32>
    %c2 = arith.constant 2 : index
    %c0_2 = arith.constant 0 : index
    %5 = vector.load %arg1[%c2, %c0_2] : memref<25x128xf32, #tpu.memory_space<vmem>>, vector<1x128xf32>
    %6 = vector.shape_cast %5 : vector<1x128xf32> to vector<128xf32>
    %7 = arith.maximumf %4, %6 : vector<128xf32>
    %c5 = arith.constant 5 : index
    %c0_3 = arith.constant 0 : index
    %8 = vector.load %arg1[%c5, %c0_3] : memref<25x128xf32, #tpu.memory_space<vmem>>, vector<1x128xf32>
    %9 = vector.shape_cast %8 : vector<1x128xf32> to vector<128xf32>
    %10 = arith.maximumf %7, %9 : vector<128xf32>
    %c6 = arith.constant 6 : index
    %c0_4 = arith.constant 0 : index
    %11 = vector.load %arg1[%c6, %c0_4] : memref<25x128xf32, #tpu.memory_space<vmem>>, vector<1x128xf32>
    %12 = vector.shape_cast %11 : vector<1x128xf32> to vector<128xf32>
    %13 = arith.maximumf %10, %12 : vector<128xf32>
    %c7 = arith.constant 7 : index
    %c0_5 = arith.constant 0 : index
    %14 = vector.load %arg1[%c7, %c0_5] : memref<25x128xf32, #tpu.memory_space<vmem>>, vector<1x128xf32>
    %15 = vector.shape_cast %14 : vector<1x128xf32> to vector<128xf32>
    %16 = arith.maximumf %13, %15 : vector<128xf32>
    %c10 = arith.constant 10 : index
    %c0_6 = arith.constant 0 : index
    %17 = vector.load %arg1[%c10, %c0_6] : memref<25x128xf32, #tpu.memory_space<vmem>>, vector<1x128xf32>
    %18 = vector.shape_cast %17 : vector<1x128xf32> to vector<128xf32>
    %19 = arith.maximumf %16, %18 : vector<128xf32>
    %c11 = arith.constant 11 : index
    %c0_7 = arith.constant 0 : index
    %20 = vector.load %arg1[%c11, %c0_7] : memref<25x128xf32, #tpu.memory_space<vmem>>, vector<1x128xf32>
    %21 = vector.shape_cast %20 : vector<1x128xf32> to vector<128xf32>
    %22 = arith.maximumf %19, %21 : vector<128xf32>
    %c12 = arith.constant 12 : index
    %c0_8 = arith.constant 0 : index
    %23 = vector.load %arg1[%c12, %c0_8] : memref<25x128xf32, #tpu.memory_space<vmem>>, vector<1x128xf32>
    %24 = vector.shape_cast %23 : vector<1x128xf32> to vector<128xf32>
    %25 = arith.maximumf %22, %24 : vector<128xf32>
    %c0_9 = arith.constant 0 : index
    %c0_10 = arith.constant 0 : index
    %26 = vector.load %arg2[%c0_9, %c0_10] : memref<4x128xf32, #tpu.memory_space<vmem>>, vector<1x128xf32>
    %27 = vector.shape_cast %26 : vector<1x128xf32> to vector<128xf32>
    %28 = vector.shape_cast %25 : vector<128xf32> to vector<1x128xf32>
    tpu.vector_store %arg2[%c0_9, %c0_10], %28 {strides = array<i32>} : memref<4x128xf32, #tpu.memory_space<vmem>>, vector<1x128xf32>,
    %c3 = arith.constant 3 : index
    %c0_11 = arith.constant 0 : index
    %29 = vector.load %arg1[%c3, %c0_11] : memref<25x128xf32, #tpu.memory_space<vmem>>, vector<1x128xf32>
    %30 = vector.shape_cast %29 : vector<1x128xf32> to vector<128xf32>
    %c4 = arith.constant 4 : index
    %c0_12 = arith.constant 0 : index
    %31 = vector.load %arg1[%c4, %c0_12] : memref<25x128xf32, #tpu.memory_space<vmem>>, vector<1x128xf32>
    %32 = vector.shape_cast %31 : vector<1x128xf32> to vector<128xf32>
    %33 = arith.maximumf %30, %32 : vector<128xf32>
    %c8 = arith.constant 8 : index
    %c0_13 = arith.constant 0 : index
    %34 = vector.load %arg1[%c8, %c0_13] : memref<25x128xf32, #tpu.memory_space<vmem>>, vector<1x128xf32>
    %35 = vector.shape_cast %34 : vector<1x128xf32> to vector<128xf32>
    %36 = arith.maximumf %33, %35 : vector<128xf32>
    %c9 = arith.constant 9 : index
    %c0_14 = arith.constant 0 : index
    %37 = vector.load %arg1[%c9, %c0_14] : memref<25x128xf32, #tpu.memory_space<vmem>>, vector<1x128xf32>
    %38 = vector.shape_cast %37 : vector<1x128xf32> to vector<128xf32>
    %39 = arith.maximumf %36, %38 : vector<128xf32>
    %c13 = arith.constant 13 : index
    %c0_15 = arith.constant 0 : index
    %40 = vector.load %arg1[%c13, %c0_15] : memref<25x128xf32, #tpu.memory_space<vmem>>, vector<1x128xf32>
    %41 = vector.shape_cast %40 : vector<1x128xf32> to vector<128xf32>
    %42 = arith.maximumf %39, %41 : vector<128xf32>
    %c14 = arith.constant 14 : index
    %c0_16 = arith.constant 0 : index
    %43 = vector.load %arg1[%c14, %c0_16] : memref<25x128xf32, #tpu.memory_space<vmem>>, vector<1x128xf32>
    %44 = vector.shape_cast %43 : vector<1x128xf32> to vector<128xf32>
    %45 = arith.maximumf %42, %44 : vector<128xf32>
    %c1_17 = arith.constant 1 : index
    %c0_18 = arith.constant 0 : index
    %46 = vector.load %arg2[%c1_17, %c0_18] : memref<4x128xf32, #tpu.memory_space<vmem>>, vector<1x128xf32>
    %47 = vector.shape_cast %46 : vector<1x128xf32> to vector<128xf32>
    %48 = vector.shape_cast %45 : vector<128xf32> to vector<1x128xf32>
    tpu.vector_store %arg2[%c1_17, %c0_18], %48 {strides = array<i32>} : memref<4x128xf32, #tpu.memory_space<vmem>>, vector<1x128xf32>,
    %c15 = arith.constant 15 : index
    %c0_19 = arith.constant 0 : index
    %49 = vector.load %arg1[%c15, %c0_19] : memref<25x128xf32, #tpu.memory_space<vmem>>, vector<1x128xf32>
    %50 = vector.shape_cast %49 : vector<1x128xf32> to vector<128xf32>
    %c16 = arith.constant 16 : index
    %c0_20 = arith.constant 0 : index
    %51 = vector.load %arg1[%c16, %c0_20] : memref<25x128xf32, #tpu.memory_space<vmem>>, vector<1x128xf32>
    %52 = vector.shape_cast %51 : vector<1x128xf32> to vector<128xf32>
    %53 = arith.maximumf %50, %52 : vector<128xf32>
    %c17 = arith.constant 17 : index
    %c0_21 = arith.constant 0 : index
    %54 = vector.load %arg1[%c17, %c0_21] : memref<25x128xf32, #tpu.memory_space<vmem>>, vector<1x128xf32>
    %55 = vector.shape_cast %54 : vector<1x128xf32> to vector<128xf32>
    %56 = arith.maximumf %53, %55 : vector<128xf32>
    %c20 = arith.constant 20 : index
    %c0_22 = arith.constant 0 : index
    %57 = vector.load %arg1[%c20, %c0_22] : memref<25x128xf32, #tpu.memory_space<vmem>>, vector<1x128xf32>
    %58 = vector.shape_cast %57 : vector<1x128xf32> to vector<128xf32>
    %59 = arith.maximumf %56, %58 : vector<128xf32>
    %c21 = arith.constant 21 : index
    %c0_23 = arith.constant 0 : index
    %60 = vector.load %arg1[%c21, %c0_23] : memref<25x128xf32, #tpu.memory_space<vmem>>, vector<1x128xf32>
    %61 = vector.shape_cast %60 : vector<1x128xf32> to vector<128xf32>
    %62 = arith.maximumf %59, %61 : vector<128xf32>
    %c22 = arith.constant 22 : index
    %c0_24 = arith.constant 0 : index
    %63 = vector.load %arg1[%c22, %c0_24] : memref<25x128xf32, #tpu.memory_space<vmem>>, vector<1x128xf32>
    %64 = vector.shape_cast %63 : vector<1x128xf32> to vector<128xf32>
    %65 = arith.maximumf %62, %64 : vector<128xf32>
    %c2_25 = arith.constant 2 : index
    %c0_26 = arith.constant 0 : index
    %66 = vector.load %arg2[%c2_25, %c0_26] : memref<4x128xf32, #tpu.memory_space<vmem>>, vector<1x128xf32>
    %67 = vector.shape_cast %66 : vector<1x128xf32> to vector<128xf32>
    %68 = vector.shape_cast %65 : vector<128xf32> to vector<1x128xf32>
    tpu.vector_store %arg2[%c2_25, %c0_26], %68 {strides = array<i32>} : memref<4x128xf32, #tpu.memory_space<vmem>>, vector<1x128xf32>,
    %c18 = arith.constant 18 : index
    %c0_27 = arith.constant 0 : index
    %69 = vector.load %arg1[%c18, %c0_27] : memref<25x128xf32, #tpu.memory_space<vmem>>, vector<1x128xf32>
    %70 = vector.shape_cast %69 : vector<1x128xf32> to vector<128xf32>
    %c19 = arith.constant 19 : index
    %c0_28 = arith.constant 0 : index
    %71 = vector.load %arg1[%c19, %c0_28] : memref<25x128xf32, #tpu.memory_space<vmem>>, vector<1x128xf32>
    %72 = vector.shape_cast %71 : vector<1x128xf32> to vector<128xf32>
    %73 = arith.maximumf %70, %72 : vector<128xf32>
    %c23 = arith.constant 23 : index
    %c0_29 = arith.constant 0 : index
    %74 = vector.load %arg1[%c23, %c0_29] : memref<25x128xf32, #tpu.memory_space<vmem>>, vector<1x128xf32>
    %75 = vector.shape_cast %74 : vector<1x128xf32> to vector<128xf32>
    %76 = arith.maximumf %73, %75 : vector<128xf32>
    %c24 = arith.constant 24 : index
    %c0_30 = arith.constant 0 : index
    %77 = vector.load %arg1[%c24, %c0_30] : memref<25x128xf32, #tpu.memory_space<vmem>>, vector<1x128xf32>
    %78 = vector.shape_cast %77 : vector<1x128xf32> to vector<128xf32>
    %79 = arith.maximumf %76, %78 : vector<128xf32>
    %c3_31 = arith.constant 3 : index
    %c0_32 = arith.constant 0 : index
    %80 = vector.load %arg2[%c3_31, %c0_32] : memref<4x128xf32, #tpu.memory_space<vmem>>, vector<1x128xf32>
    %81 = vector.shape_cast %80 : vector<1x128xf32> to vector<128xf32>
    %82 = vector.shape_cast %79 : vector<128xf32> to vector<1x128xf32>
    tpu.vector_store %arg2[%c3_31, %c0_32], %82 {strides = array<i32>} : memref<4x128xf32, #tpu.memory_space<vmem>>, vector<1x128xf32>,
    return
  }
  func.func @transform_0(%arg0: i32) -> (i32, i32) {
    %c0_i32 = arith.constant 0 : i32
    %c0_i32_0 = arith.constant 0 : i32
    return %c0_i32, %arg0 : i32, i32
  }
  func.func @transform_1(%arg0: i32) -> (i32, i32) {
    %c0_i32 = arith.constant 0 : i32
    %c0_i32_0 = arith.constant 0 : i32
    return %c0_i32, %arg0 : i32, i32
  }
}

</mosaic_0001>

<llo_original>
// kernel: tpu_custom_call.1
$region0: #{tpu_custom_call.1}
  #allocation0 [shape = 'u32[]', space=smem, size = 0x4, offset = 0x4, fixed_abs, tag = 'smem constant byte address 0x4 - core index']
  #allocation1 [shape = 'u32[72,128]{1,0:T(1,128)}', space=vmem, size = 0x9000, scoped, tag = 'internal scratch']
  %s0 = inlined_call_operand.hbm [shape: f32[25,128], index: 0, kind: input, shape index: {}]
  %s1 = inlined_call_operand.hbm [shape: f32[4,128], index: 1, kind: output, shape index: {}]
  %s2 = sld [smem:[#allocation0]]
  $region18: #{tpu_custom_call.1} parent=0
    _
  %s4 = ssub.s32 1, %s2
  %s5 = scalar_select 0, %s4, %s2
  $region1: #{tpu_custom_call.1} parent=0
    #allocation2 [shape = 'u8[16384]{0}', space=vmem, size = 0x4000, scoped, tag = 'input window, operand 0, single buffered']
    #allocation3 [shape = 's32[1]{0}', space=sflag, size = 0x4, scoped, tag = 'scoped memory for tpu_custom_call.1']
    #allocation4 [shape = 's32[1]{0}', space=sflag, size = 0x4, scoped, tag = 'scoped memory for tpu_custom_call.1']
    #allocation5 [shape = 'u8[2048]{0}', space=vmem, size = 0x800, scoped, tag = 'output window, operand 0, single buffered']
    %6 = vsyncpa [#allocation3], 0
    %7 = vsyncpa [#allocation4], 0
    // Predicated region
    $region2: #{tpu_custom_call.1} parent=1 // pred_check
      _
    $region3: #{tpu_custom_call.1} parent=1 // pred_check_branch
      %9 = sbr.rel (0) target = $region5
    $region4: #{tpu_custom_call.1} parent=1 // pred_region
      %11 = vsyncadd [#allocation3], 0
      %s12 = sshll.u32 %s0, 4
      %s13 = int_to_ptr.hbm [resolvable:$true] %s12
      %s14 = sshll.u32 [#allocation2], 4
      %s15 = int_to_ptr.vmem [resolvable:$true] %s14
      %20 = dma.hbm_to_vmem [thread:$0]  %s13, 512, %s15, [#allocation3], 128, 128, 8
    $region5: #{tpu_custom_call.1} parent=1 // pred_fallthru
      _
    // Predicated region
    $region6: #{tpu_custom_call.1} parent=1 // pred_check
      _
    $region7: #{tpu_custom_call.1} parent=1 // pred_check_branch
      %22 = sbr.rel (0) target = $region9
    $region8: #{tpu_custom_call.1} parent=1 // pred_region
      %24 = dma.done [#allocation3], 512
    $region9: #{tpu_custom_call.1} parent=1 // pred_fallthru
      _
    %v25 = vld [vmem:[#allocation2] sm:$0x1]
    %v26 = vld [vmem:[#allocation2 + $0x1] sm:$0x1]
    %v27 = vmax.f32 %v25, %v26
    %v28 = vld [vmem:[#allocation2 + $0x2] sm:$0x1]
    %v29 = vmax.f32 %v27, %v28
    %v30 = vld [vmem:[#allocation2 + $0x5] sm:$0x1]
    %v31 = vmax.f32 %v29, %v30
    %v32 = vld [vmem:[#allocation2 + $0x6] sm:$0x1]
    %v33 = vmax.f32 %v31, %v32
    %v34 = vld [vmem:[#allocation2 + $0x7] sm:$0x1]
    %v35 = vmax.f32 %v33, %v34
    %v36 = vld [vmem:[#allocation2 + $0xa] sm:$0x1]
    %v37 = vmax.f32 %v35, %v36
    %v38 = vld [vmem:[#allocation2 + $0xb] sm:$0x1]
    %v39 = vmax.f32 %v37, %v38
    %v40 = vld [vmem:[#allocation2 + $0xc] sm:$0x1]
    %v41 = vmax.f32 %v39, %v40
    %42 = vst [vmem:[#allocation5] sm:$0x1] %v41
    %v43 = vld [vmem:[#allocation2 + $0x3] sm:$0x1]
    %v44 = vld [vmem:[#allocation2 + $0x4] sm:$0x1]
    %v45 = vmax.f32 %v43, %v44
    %v46 = vld [vmem:[#allocation2 + $0x8] sm:$0x1]
    %v47 = vmax.f32 %v45, %v46
    %v48 = vld [vmem:[#allocation2 + $0x9] sm:$0x1]
    %v49 = vmax.f32 %v47, %v48
    %v50 = vld [vmem:[#allocation2 + $0xd] sm:$0x1]
    %v51 = vmax.f32 %v49, %v50
    %v52 = vld [vmem:[#allocation2 + $0xe] sm:$0x1]
    %v53 = vmax.f32 %v51, %v52
    %54 = vst [vmem:[#allocation5 + $0x1] sm:$0x1] %v53
    %v55 = vld [vmem:[#allocation2 + $0xf] sm:$0x1]
    %v56 = vld [vmem:[#allocation2 + $0x10] sm:$0x1]
    %v57 = vmax.f32 %v55, %v56
    %v58 = vld [vmem:[#allocation2 + $0x11] sm:$0x1]
    %v59 = vmax.f32 %v57, %v58
    %v60 = vld [vmem:[#allocation2 + $0x14] sm:$0x1]
    %v61 = vmax.f32 %v59, %v60
    %v62 = vld [vmem:[#allocation2 + $0x15] sm:$0x1]
    %v63 = vmax.f32 %v61, %v62
    %v64 = vld [vmem:[#allocation2 + $0x16] sm:$0x1]
    %v65 = vmax.f32 %v63, %v64
    %66 = vst [vmem:[#allocation5 + $0x2] sm:$0x1] %v65
    %v67 = vld [vmem:[#allocation2 + $0x12] sm:$0x1]
    %v68 = vld [vmem:[#allocation2 + $0x13] sm:$0x1]
    %v69 = vmax.f32 %v67, %v68
    %v70 = vld [vmem:[#allocation2 + $0x17] sm:$0x1]
    %v71 = vmax.f32 %v69, %v70
    %v72 = vld [vmem:[#allocation2 + $0x18] sm:$0x1]
    %v73 = vmax.f32 %v71, %v72
    %74 = vst [vmem:[#allocation5 + $0x3] sm:$0x1] %v73
    // Predicated region
    $region10: #{tpu_custom_call.1} parent=1 // pred_check
      _
    $region11: #{tpu_custom_call.1} parent=1 // pred_check_branch
      %76 = sbr.rel (0) target = $region13
    $region12: #{tpu_custom_call.1} parent=1 // pred_region
      %78 = vsyncadd [#allocation4], 0
      %s80 = sshll.u32 [#allocation5], 4
      %s81 = int_to_ptr.vmem [resolvable:$true] %s80
      %s82 = sshll.u32 %s1, 4
      %s83 = int_to_ptr.hbm [resolvable:$true] %s82
      %85 = dma.vmem_to_hbm [thread:$0]  %s81, 64, %s83, [#allocation4]
    $region13: #{tpu_custom_call.1} parent=1 // pred_fallthru
      _
    // Predicated region
    $region14: #{tpu_custom_call.1} parent=1 // pred_check
      _
    $region15: #{tpu_custom_call.1} parent=1 // pred_check_branch
      %87 = sbr.rel (0) target = $region17
    $region16: #{tpu_custom_call.1} parent=1 // pred_region
      %89 = dma.done [#allocation4], 64
    $region17: #{tpu_custom_call.1} parent=1 // pred_fallthru
      _
    %90 = vsyncpa [#allocation3], 1
    %91 = vsyncpa [#allocation4], 1

</llo_original>
